<compile_context>
chip_gen: v7x
topology: tpu7x:2x2x1
jax: 0.10.0
libtpu: 0.0.40
codegen_flags: <defaults>
</compile_context>

<pallas_src>
import functools

import jax
import jax.numpy as jnp
from jax.experimental import pallas as pl
from jax.experimental.pallas import tpu as pltpu


def _round_up(x, m):
    return ((x + m - 1) // m) * m


def _leaky_relu(x, slope=0.1):
    return jnp.where(x >= 0, x, slope * x)


def _conv1x1_vpu(x, w, b):
    """1x1 conv on channels-first data as VPU broadcast MACs (no MXU).

    x: (C_in, T)   activations — channels on sublanes, spatial on lanes
    w: (C_out, C_in) conv weight (PyTorch layout, 1x1 kernel squeezed)
    b: (C_out, 1)  bias
    returns (C_out, T)
    """
    c_in = x.shape[0]
    acc = w[:, 0:1] * x[0:1, :]
    for c in range(1, c_in):            # static unroll — C is tiny
        acc = acc + w[:, c:c + 1] * x[c:c + 1, :]
    return acc + b


def freblock_kernel(re_ref, im_ref, w_ref, b_ref, out_re_ref, out_im_ref):
    re = re_ref[...]          # (C, T)
    im = im_ref[...]          # (C, T)
    w = w_ref[...]            # (4, C, C): [wm1, wm2, wp1, wp2]
    b = b_ref[...]            # (4, C, 1): [bm1, bm2, bp1, bp2]

    # torch.abs / torch.angle on complex input
    mag = jnp.sqrt(re * re + im * im)
    pha = jnp.arctan2(im, re)

    # processmag: conv1x1 -> LeakyReLU(0.1) -> conv1x1
    m = _conv1x1_vpu(mag, w[0], b[0])
    m = _leaky_relu(m)
    m = _conv1x1_vpu(m, w[1], b[1])

    # processpha: conv1x1 -> LeakyReLU(0.1) -> conv1x1
    p = _conv1x1_vpu(pha, w[2], b[2])
    p = _leaky_relu(p)
    p = _conv1x1_vpu(p, w[3], b[3])

    # recombine into real / imag
    out_re_ref[...] = m * jnp.cos(p)
    out_im_ref[...] = m * jnp.sin(p)


def make_freblock_params(nc, key):
    """Deterministic parameter init mimicking nn.Conv2d(nc, nc, 1) defaults."""
    keys = jax.random.split(key, 8)
    bound = 1.0 / (nc ** 0.5)  # fan_in = nc * 1 * 1

    def w(k):  # (C_out, C_in) — 1x1 kernel squeezed
        return jax.random.uniform(k, (nc, nc), jnp.float32, -bound, bound)

    def b(k):  # (C_out,)
        return jax.random.uniform(k, (nc,), jnp.float32, -bound, bound)

    return dict(
        wm1=w(keys[0]), bm1=b(keys[1]), wm2=w(keys[2]), bm2=b(keys[3]),
        wp1=w(keys[4]), bp1=b(keys[5]), wp2=w(keys[6]), bp2=b(keys[7]),
    )


@functools.partial(jax.jit, static_argnames=("tile_hw",))
def freblock_forward(x_complex, params, tile_hw=4096):
    N, C, H, W = x_complex.shape
    HW = H * W

    # NCHW -> (N, C, HW): pure reshape, no data movement / transpose.
    x3 = x_complex.reshape(N, C, HW)
    re = jnp.real(x3).astype(jnp.float32)
    im = jnp.imag(x3).astype(jnp.float32)
    # TODO(synk): re/im extraction is one extra XLA pass; a bitcast+deinterleave
    # inside the kernel could remove it, omitted to keep layout lane-dense.

    # Spatial tile: multiple of 128 lanes, clamped to (padded) HW.
    t = min(tile_hw, _round_up(HW, 128))
    t = max(128, (t // 128) * 128)
    hw_pad = _round_up(HW, t)
    if hw_pad != HW:
        pad = ((0, 0), (0, 0), (0, hw_pad - HW))
        re = jnp.pad(re, pad)
        im = jnp.pad(im, pad)
    nt = hw_pad // t

    # Pack the 8 conv params into two small resident slabs.
    w_all = jnp.stack([params["wm1"], params["wm2"],
                       params["wp1"], params["wp2"]]).astype(jnp.float32)       # (4,C,C)
    b_all = jnp.stack([params["bm1"], params["bm2"],
                       params["bp1"], params["bp2"]]).astype(jnp.float32)[..., None]  # (4,C,1)

    data_spec = pl.BlockSpec((None, C, t), lambda n, j: (n, 0, j))
    w_spec = pl.BlockSpec((4, C, C), lambda n, j: (0, 0, 0))
    b_spec = pl.BlockSpec((4, C, 1), lambda n, j: (0, 0, 0))

    out_re, out_im = pl.pallas_call(
        freblock_kernel,
        out_shape=(jax.ShapeDtypeStruct((N, C, hw_pad), jnp.float32),
                   jax.ShapeDtypeStruct((N, C, hw_pad), jnp.float32)),
        grid_spec=pltpu.PrefetchScalarGridSpec(
            num_scalar_prefetch=0,
            grid=(N, nt),
            in_specs=[data_spec, data_spec, w_spec, b_spec],
            out_specs=[data_spec, data_spec],
        ),
        compiler_params=pltpu.CompilerParams(
            dimension_semantics=("parallel", "parallel"),
            # Explicit limit: safe on v7x (64 MiB physical), plenty for
            # 4 data streams x 2 pipeline buffers at these tile sizes.
            vmem_limit_bytes=32 * 1024 * 1024,
        ),
    )(re, im, w_all, b_all)

    # Drop spatial padding, restore NCHW, rebuild complex output.
    out_re = out_re[:, :, :HW].reshape(N, C, H, W)
    out_im = out_im[:, :, :HW].reshape(N, C, H, W)
    return jax.lax.complex(out_re, out_im)


def freblock_reference(x_complex, params):
    """Pure-JAX reference for correctness checking."""
    re = jnp.real(x_complex).astype(jnp.float32)
    im = jnp.imag(x_complex).astype(jnp.float32)
    mag = jnp.sqrt(re * re + im * im)
    pha = jnp.arctan2(im, re)

    def conv1x1(x_nchw, w, b):  # x: (N,C,H,W), w: (Cout,Cin), b: (Cout,)
        y = jnp.einsum("nchw,oc->nohw", x_nchw, w,
                       precision=jax.lax.Precision.HIGHEST)
        return y + b[None, :, None, None]

    m = conv1x1(mag, params["wm1"], params["bm1"])
    m = jnp.where(m >= 0, m, 0.1 * m)
    m = conv1x1(m, params["wm2"], params["bm2"])
    p = conv1x1(pha, params["wp1"], params["bp1"])
    p = jnp.where(p >= 0, p, 0.1 * p)
    p = conv1x1(p, params["wp2"], params["bp2"])
    return jax.lax.complex(m * jnp.cos(p), m * jnp.sin(p))


if __name__ == "__main__":
    key = jax.random.PRNGKey(0)
    k_re, k_im, k_params = jax.random.split(key, 3)

    N, C, H, W = 2, 4, 16, 16  # small but representative (HW = 256)
    x_re = jax.random.normal(k_re, (N, C, H, W), jnp.float32)
    x_im = jax.random.normal(k_im, (N, C, H, W), jnp.float32)
    x = jax.lax.complex(x_re, x_im)

    params = make_freblock_params(C, k_params)

    out = freblock_forward(x, params)
    out = jax.block_until_ready(out)

    ref = freblock_reference(x, params)
    assert out.shape == (N, C, H, W) and out.dtype == jnp.complex64
    assert jnp.allclose(jnp.real(out), jnp.real(ref), atol=1e-4, rtol=1e-4)
    assert jnp.allclose(jnp.imag(out), jnp.imag(ref), atol=1e-4, rtol=1e-4)

    print("KERNEL_OK")
</pallas_src>

<mosaic_0001>
module attributes {stable_mosaic.version = 11 : i64} {
  func.func @freblock_kernel(%arg0: i32, %arg1: i32, %arg2: memref<1x4x256xf32, #tpu.memory_space<vmem>>, %arg3: memref<1x4x256xf32, #tpu.memory_space<vmem>>, %arg4: memref<4x4x4xf32, #tpu.memory_space<vmem>>, %arg5: memref<4x4x1xf32, #tpu.memory_space<vmem>>, %arg6: memref<1x4x256xf32, #tpu.memory_space<vmem>>, %arg7: memref<1x4x256xf32, #tpu.memory_space<vmem>>) attributes {dimension_semantics = [#tpu.dimension_semantics<parallel>, #tpu.dimension_semantics<parallel>], iteration_bounds = array<i64: 2, 1>, scalar_prefetch = 0 : i64, scratch_operands = 0 : i64, tpu.core_type = #tpu.core_type<tc>, window_params = [{transform_indices = @transform_0, window_bounds = array<i64: 1, 4, 256>}, {transform_indices = @transform_1, window_bounds = array<i64: 1, 4, 256>}, {pipeline_mode = #tpu.pipeline_mode<synchronous>, transform_indices = @transform_2, window_bounds = array<i64: 4, 4, 4>}, {pipeline_mode = #tpu.pipeline_mode<synchronous>, transform_indices = @transform_3, window_bounds = array<i64: 4, 4, 1>}, {transform_indices = @transform_4, window_bounds = array<i64: 1, 4, 256>}, {transform_indices = @transform_5, window_bounds = array<i64: 1, 4, 256>}]} {
    %c0 = arith.constant 0 : index
    %c0_0 = arith.constant 0 : index
    %c0_1 = arith.constant 0 : index
    %0 = vector.load %arg2[%c0, %c0_0, %c0_1] : memref<1x4x256xf32, #tpu.memory_space<vmem>>, vector<1x4x256xf32>
    %1 = vector.shape_cast %0 : vector<1x4x256xf32> to vector<4x256xf32>
    %c0_2 = arith.constant 0 : index
    %c0_3 = arith.constant 0 : index
    %c0_4 = arith.constant 0 : index
    %2 = vector.load %arg3[%c0_2, %c0_3, %c0_4] : memref<1x4x256xf32, #tpu.memory_space<vmem>>, vector<1x4x256xf32>
    %3 = vector.shape_cast %2 : vector<1x4x256xf32> to vector<4x256xf32>
    %c0_5 = arith.constant 0 : index
    %c0_6 = arith.constant 0 : index
    %c0_7 = arith.constant 0 : index
    %4 = vector.load %arg4[%c0_5, %c0_6, %c0_7] : memref<4x4x4xf32, #tpu.memory_space<vmem>>, vector<4x4x4xf32>
    %c0_8 = arith.constant 0 : index
    %c0_9 = arith.constant 0 : index
    %c0_10 = arith.constant 0 : index
    %5 = vector.load %arg5[%c0_8, %c0_9, %c0_10] : memref<4x4x1xf32, #tpu.memory_space<vmem>>, vector<4x4x1xf32>
    %6 = arith.mulf %1, %1 : vector<4x256xf32>
    %7 = arith.mulf %3, %3 : vector<4x256xf32>
    %8 = arith.addf %6, %7 : vector<4x256xf32>
    %9 = math.sqrt %8 : vector<4x256xf32>
    %10 = math.atan2 %3, %1 : vector<4x256xf32>
    %11 = vector.extract_strided_slice %4 {offsets = [0, 0, 0], sizes = [1, 4, 4], strides = [1, 1, 1]} : vector<4x4x4xf32> to vector<1x4x4xf32>
    %12 = vector.shape_cast %11 : vector<1x4x4xf32> to vector<4x4xf32>
    %13 = vector.extract_strided_slice %5 {offsets = [0, 0, 0], sizes = [1, 4, 1], strides = [1, 1, 1]} : vector<4x4x1xf32> to vector<1x4x1xf32>
    %14 = vector.shape_cast %13 : vector<1x4x1xf32> to vector<4x1xf32>
    %15 = vector.extract_strided_slice %12 {offsets = [0, 0], sizes = [4, 1], strides = [1, 1]} : vector<4x4xf32> to vector<4x1xf32>
    %16 = vector.extract_strided_slice %9 {offsets = [0, 0], sizes = [1, 256], strides = [1, 1]} : vector<4x256xf32> to vector<1x256xf32>
    %17 = vector.broadcast %15 : vector<4x1xf32> to vector<4x256xf32>
    %18 = vector.broadcast %16 : vector<1x256xf32> to vector<4x256xf32>
    %19 = arith.mulf %17, %18 : vector<4x256xf32>
    %20 = vector.extract_strided_slice %12 {offsets = [0, 1], sizes = [4, 1], strides = [1, 1]} : vector<4x4xf32> to vector<4x1xf32>
    %21 = vector.extract_strided_slice %9 {offsets = [1, 0], sizes = [1, 256], strides = [1, 1]} : vector<4x256xf32> to vector<1x256xf32>
    %22 = vector.broadcast %20 : vector<4x1xf32> to vector<4x256xf32>
    %23 = vector.broadcast %21 : vector<1x256xf32> to vector<4x256xf32>
    %24 = arith.mulf %22, %23 : vector<4x256xf32>
    %25 = arith.addf %19, %24 : vector<4x256xf32>
    %26 = vector.extract_strided_slice %12 {offsets = [0, 2], sizes = [4, 1], strides = [1, 1]} : vector<4x4xf32> to vector<4x1xf32>
    %27 = vector.extract_strided_slice %9 {offsets = [2, 0], sizes = [1, 256], strides = [1, 1]} : vector<4x256xf32> to vector<1x256xf32>
    %28 = vector.broadcast %26 : vector<4x1xf32> to vector<4x256xf32>
    %29 = vector.broadcast %27 : vector<1x256xf32> to vector<4x256xf32>
    %30 = arith.mulf %28, %29 : vector<4x256xf32>
    %31 = arith.addf %25, %30 : vector<4x256xf32>
    %32 = vector.extract_strided_slice %12 {offsets = [0, 3], sizes = [4, 1], strides = [1, 1]} : vector<4x4xf32> to vector<4x1xf32>
    %33 = vector.extract_strided_slice %9 {offsets = [3, 0], sizes = [1, 256], strides = [1, 1]} : vector<4x256xf32> to vector<1x256xf32>
    %34 = vector.broadcast %32 : vector<4x1xf32> to vector<4x256xf32>
    %35 = vector.broadcast %33 : vector<1x256xf32> to vector<4x256xf32>
    %36 = arith.mulf %34, %35 : vector<4x256xf32>
    %37 = arith.addf %31, %36 : vector<4x256xf32>
    %38 = vector.broadcast %14 : vector<4x1xf32> to vector<4x256xf32>
    %39 = arith.addf %37, %38 : vector<4x256xf32>
    %cst = arith.constant 0.000000e+00 : f32
    %40 = vector.broadcast %cst : f32 to vector<4x256xf32>
    %41 = arith.cmpf oge, %39, %40 : vector<4x256xf32>
    %cst_11 = arith.constant 1.000000e-01 : f32
    %42 = vector.broadcast %cst_11 : f32 to vector<4x256xf32>
    %43 = arith.mulf %42, %39 : vector<4x256xf32>
    %44 = arith.select %41, %39, %43 : vector<4x256xi1>, vector<4x256xf32>
    %45 = vector.extract_strided_slice %4 {offsets = [1, 0, 0], sizes = [1, 4, 4], strides = [1, 1, 1]} : vector<4x4x4xf32> to vector<1x4x4xf32>
    %46 = vector.shape_cast %45 : vector<1x4x4xf32> to vector<4x4xf32>
    %47 = vector.extract_strided_slice %5 {offsets = [1, 0, 0], sizes = [1, 4, 1], strides = [1, 1, 1]} : vector<4x4x1xf32> to vector<1x4x1xf32>
    %48 = vector.shape_cast %47 : vector<1x4x1xf32> to vector<4x1xf32>
    %49 = vector.extract_strided_slice %46 {offsets = [0, 0], sizes = [4, 1], strides = [1, 1]} : vector<4x4xf32> to vector<4x1xf32>
    %50 = vector.extract_strided_slice %44 {offsets = [0, 0], sizes = [1, 256], strides = [1, 1]} : vector<4x256xf32> to vector<1x256xf32>
    %51 = vector.broadcast %49 : vector<4x1xf32> to vector<4x256xf32>
    %52 = vector.broadcast %50 : vector<1x256xf32> to vector<4x256xf32>
    %53 = arith.mulf %51, %52 : vector<4x256xf32>
    %54 = vector.extract_strided_slice %46 {offsets = [0, 1], sizes = [4, 1], strides = [1, 1]} : vector<4x4xf32> to vector<4x1xf32>
    %55 = vector.extract_strided_slice %44 {offsets = [1, 0], sizes = [1, 256], strides = [1, 1]} : vector<4x256xf32> to vector<1x256xf32>
    %56 = vector.broadcast %54 : vector<4x1xf32> to vector<4x256xf32>
    %57 = vector.broadcast %55 : vector<1x256xf32> to vector<4x256xf32>
    %58 = arith.mulf %56, %57 : vector<4x256xf32>
    %59 = arith.addf %53, %58 : vector<4x256xf32>
    %60 = vector.extract_strided_slice %46 {offsets = [0, 2], sizes = [4, 1], strides = [1, 1]} : vector<4x4xf32> to vector<4x1xf32>
    %61 = vector.extract_strided_slice %44 {offsets = [2, 0], sizes = [1, 256], strides = [1, 1]} : vector<4x256xf32> to vector<1x256xf32>
    %62 = vector.broadcast %60 : vector<4x1xf32> to vector<4x256xf32>
    %63 = vector.broadcast %61 : vector<1x256xf32> to vector<4x256xf32>
    %64 = arith.mulf %62, %63 : vector<4x256xf32>
    %65 = arith.addf %59, %64 : vector<4x256xf32>
    %66 = vector.extract_strided_slice %46 {offsets = [0, 3], sizes = [4, 1], strides = [1, 1]} : vector<4x4xf32> to vector<4x1xf32>
    %67 = vector.extract_strided_slice %44 {offsets = [3, 0], sizes = [1, 256], strides = [1, 1]} : vector<4x256xf32> to vector<1x256xf32>
    %68 = vector.broadcast %66 : vector<4x1xf32> to vector<4x256xf32>
    %69 = vector.broadcast %67 : vector<1x256xf32> to vector<4x256xf32>
    %70 = arith.mulf %68, %69 : vector<4x256xf32>
    %71 = arith.addf %65, %70 : vector<4x256xf32>
    %72 = vector.broadcast %48 : vector<4x1xf32> to vector<4x256xf32>
    %73 = arith.addf %71, %72 : vector<4x256xf32>
    %74 = vector.extract_strided_slice %4 {offsets = [2, 0, 0], sizes = [1, 4, 4], strides = [1, 1, 1]} : vector<4x4x4xf32> to vector<1x4x4xf32>
    %75 = vector.shape_cast %74 : vector<1x4x4xf32> to vector<4x4xf32>
    %76 = vector.extract_strided_slice %5 {offsets = [2, 0, 0], sizes = [1, 4, 1], strides = [1, 1, 1]} : vector<4x4x1xf32> to vector<1x4x1xf32>
    %77 = vector.shape_cast %76 : vector<1x4x1xf32> to vector<4x1xf32>
    %78 = vector.extract_strided_slice %75 {offsets = [0, 0], sizes = [4, 1], strides = [1, 1]} : vector<4x4xf32> to vector<4x1xf32>
    %79 = vector.extract_strided_slice %10 {offsets = [0, 0], sizes = [1, 256], strides = [1, 1]} : vector<4x256xf32> to vector<1x256xf32>
    %80 = vector.broadcast %78 : vector<4x1xf32> to vector<4x256xf32>
    %81 = vector.broadcast %79 : vector<1x256xf32> to vector<4x256xf32>
    %82 = arith.mulf %80, %81 : vector<4x256xf32>
    %83 = vector.extract_strided_slice %75 {offsets = [0, 1], sizes = [4, 1], strides = [1, 1]} : vector<4x4xf32> to vector<4x1xf32>
    %84 = vector.extract_strided_slice %10 {offsets = [1, 0], sizes = [1, 256], strides = [1, 1]} : vector<4x256xf32> to vector<1x256xf32>
    %85 = vector.broadcast %83 : vector<4x1xf32> to vector<4x256xf32>
    %86 = vector.broadcast %84 : vector<1x256xf32> to vector<4x256xf32>
    %87 = arith.mulf %85, %86 : vector<4x256xf32>
    %88 = arith.addf %82, %87 : vector<4x256xf32>
    %89 = vector.extract_strided_slice %75 {offsets = [0, 2], sizes = [4, 1], strides = [1, 1]} : vector<4x4xf32> to vector<4x1xf32>
    %90 = vector.extract_strided_slice %10 {offsets = [2, 0], sizes = [1, 256], strides = [1, 1]} : vector<4x256xf32> to vector<1x256xf32>
    %91 = vector.broadcast %89 : vector<4x1xf32> to vector<4x256xf32>
    %92 = vector.broadcast %90 : vector<1x256xf32> to vector<4x256xf32>
    %93 = arith.mulf %91, %92 : vector<4x256xf32>
    %94 = arith.addf %88, %93 : vector<4x256xf32>
    %95 = vector.extract_strided_slice %75 {offsets = [0, 3], sizes = [4, 1], strides = [1, 1]} : vector<4x4xf32> to vector<4x1xf32>
    %96 = vector.extract_strided_slice %10 {offsets = [3, 0], sizes = [1, 256], strides = [1, 1]} : vector<4x256xf32> to vector<1x256xf32>
    %97 = vector.broadcast %95 : vector<4x1xf32> to vector<4x256xf32>
    %98 = vector.broadcast %96 : vector<1x256xf32> to vector<4x256xf32>
    %99 = arith.mulf %97, %98 : vector<4x256xf32>
    %100 = arith.addf %94, %99 : vector<4x256xf32>
    %101 = vector.broadcast %77 : vector<4x1xf32> to vector<4x256xf32>
    %102 = arith.addf %100, %101 : vector<4x256xf32>
    %cst_12 = arith.constant 0.000000e+00 : f32
    %103 = vector.broadcast %cst_12 : f32 to vector<4x256xf32>
    %104 = arith.cmpf oge, %102, %103 : vector<4x256xf32>
    %cst_13 = arith.constant 1.000000e-01 : f32
    %105 = vector.broadcast %cst_13 : f32 to vector<4x256xf32>
    %106 = arith.mulf %105, %102 : vector<4x256xf32>
    %107 = arith.select %104, %102, %106 : vector<4x256xi1>, vector<4x256xf32>
    %108 = vector.extract_strided_slice %4 {offsets = [3, 0, 0], sizes = [1, 4, 4], strides = [1, 1, 1]} : vector<4x4x4xf32> to vector<1x4x4xf32>
    %109 = vector.shape_cast %108 : vector<1x4x4xf32> to vector<4x4xf32>
    %110 = vector.extract_strided_slice %5 {offsets = [3, 0, 0], sizes = [1, 4, 1], strides = [1, 1, 1]} : vector<4x4x1xf32> to vector<1x4x1xf32>
    %111 = vector.shape_cast %110 : vector<1x4x1xf32> to vector<4x1xf32>
    %112 = vector.extract_strided_slice %109 {offsets = [0, 0], sizes = [4, 1], strides = [1, 1]} : vector<4x4xf32> to vector<4x1xf32>
    %113 = vector.extract_strided_slice %107 {offsets = [0, 0], sizes = [1, 256], strides = [1, 1]} : vector<4x256xf32> to vector<1x256xf32>
    %114 = vector.broadcast %112 : vector<4x1xf32> to vector<4x256xf32>
    %115 = vector.broadcast %113 : vector<1x256xf32> to vector<4x256xf32>
    %116 = arith.mulf %114, %115 : vector<4x256xf32>
    %117 = vector.extract_strided_slice %109 {offsets = [0, 1], sizes = [4, 1], strides = [1, 1]} : vector<4x4xf32> to vector<4x1xf32>
    %118 = vector.extract_strided_slice %107 {offsets = [1, 0], sizes = [1, 256], strides = [1, 1]} : vector<4x256xf32> to vector<1x256xf32>
    %119 = vector.broadcast %117 : vector<4x1xf32> to vector<4x256xf32>
    %120 = vector.broadcast %118 : vector<1x256xf32> to vector<4x256xf32>
    %121 = arith.mulf %119, %120 : vector<4x256xf32>
    %122 = arith.addf %116, %121 : vector<4x256xf32>
    %123 = vector.extract_strided_slice %109 {offsets = [0, 2], sizes = [4, 1], strides = [1, 1]} : vector<4x4xf32> to vector<4x1xf32>
    %124 = vector.extract_strided_slice %107 {offsets = [2, 0], sizes = [1, 256], strides = [1, 1]} : vector<4x256xf32> to vector<1x256xf32>
    %125 = vector.broadcast %123 : vector<4x1xf32> to vector<4x256xf32>
    %126 = vector.broadcast %124 : vector<1x256xf32> to vector<4x256xf32>
    %127 = arith.mulf %125, %126 : vector<4x256xf32>
    %128 = arith.addf %122, %127 : vector<4x256xf32>
    %129 = vector.extract_strided_slice %109 {offsets = [0, 3], sizes = [4, 1], strides = [1, 1]} : vector<4x4xf32> to vector<4x1xf32>
    %130 = vector.extract_strided_slice %107 {offsets = [3, 0], sizes = [1, 256], strides = [1, 1]} : vector<4x256xf32> to vector<1x256xf32>
    %131 = vector.broadcast %129 : vector<4x1xf32> to vector<4x256xf32>
    %132 = vector.broadcast %130 : vector<1x256xf32> to vector<4x256xf32>
    %133 = arith.mulf %131, %132 : vector<4x256xf32>
    %134 = arith.addf %128, %133 : vector<4x256xf32>
    %135 = vector.broadcast %111 : vector<4x1xf32> to vector<4x256xf32>
    %136 = arith.addf %134, %135 : vector<4x256xf32>
    %137 = math.cos %136 : vector<4x256xf32>
    %138 = arith.mulf %73, %137 : vector<4x256xf32>
    %c0_14 = arith.constant 0 : index
    %c0_15 = arith.constant 0 : index
    %c0_16 = arith.constant 0 : index
    %139 = vector.load %arg6[%c0_14, %c0_15, %c0_16] : memref<1x4x256xf32, #tpu.memory_space<vmem>>, vector<1x4x256xf32>
    %140 = vector.shape_cast %139 : vector<1x4x256xf32> to vector<4x256xf32>
    %141 = vector.shape_cast %138 : vector<4x256xf32> to vector<1x4x256xf32>
    tpu.vector_store %arg6[%c0_14, %c0_15, %c0_16], %141 {strides = array<i32>} : memref<1x4x256xf32, #tpu.memory_space<vmem>>, vector<1x4x256xf32>,
    %142 = math.sin %136 : vector<4x256xf32>
    %143 = arith.mulf %73, %142 : vector<4x256xf32>
    %c0_17 = arith.constant 0 : index
    %c0_18 = arith.constant 0 : index
    %c0_19 = arith.constant 0 : index
    %144 = vector.load %arg7[%c0_17, %c0_18, %c0_19] : memref<1x4x256xf32, #tpu.memory_space<vmem>>, vector<1x4x256xf32>
    %145 = vector.shape_cast %144 : vector<1x4x256xf32> to vector<4x256xf32>
    %146 = vector.shape_cast %143 : vector<4x256xf32> to vector<1x4x256xf32>
    tpu.vector_store %arg7[%c0_17, %c0_18, %c0_19], %146 {strides = array<i32>} : memref<1x4x256xf32, #tpu.memory_space<vmem>>, vector<1x4x256xf32>,
    return
  }
  func.func @transform_0(%arg0: i32, %arg1: i32) -> (i32, i32, i32) {
    %c0_i32 = arith.constant 0 : i32
    %c0_i32_0 = arith.constant 0 : i32
    return %arg0, %c0_i32, %arg1 : i32, i32, i32
  }
  func.func @transform_1(%arg0: i32, %arg1: i32) -> (i32, i32, i32) {
    %c0_i32 = arith.constant 0 : i32
    %c0_i32_0 = arith.constant 0 : i32
    return %arg0, %c0_i32, %arg1 : i32, i32, i32
  }
  func.func @transform_2(%arg0: i32, %arg1: i32) -> (i32, i32, i32) {
    %c0_i32 = arith.constant 0 : i32
    %c0_i32_0 = arith.constant 0 : i32
    %c0_i32_1 = arith.constant 0 : i32
    %c0_i32_2 = arith.constant 0 : i32
    return %c0_i32, %c0_i32_0, %c0_i32_1 : i32, i32, i32
  }
  func.func @transform_3(%arg0: i32, %arg1: i32) -> (i32, i32, i32) {
    %c0_i32 = arith.constant 0 : i32
    %c0_i32_0 = arith.constant 0 : i32
    %c0_i32_1 = arith.constant 0 : i32
    %c0_i32_2 = arith.constant 0 : i32
    return %c0_i32, %c0_i32_0, %c0_i32_1 : i32, i32, i32
  }
  func.func @transform_4(%arg0: i32, %arg1: i32) -> (i32, i32, i32) {
    %c0_i32 = arith.constant 0 : i32
    %c0_i32_0 = arith.constant 0 : i32
    return %arg0, %c0_i32, %arg1 : i32, i32, i32
  }
  func.func @transform_5(%arg0: i32, %arg1: i32) -> (i32, i32, i32) {
    %c0_i32 = arith.constant 0 : i32
    %c0_i32_0 = arith.constant 0 : i32
    return %arg0, %c0_i32, %arg1 : i32, i32, i32
  }
}

</mosaic_0001>

<llo_original>
// kernel: custom-call.1
$region0: #{custom-call.1}
  %s0 = inlined_call_operand.hbm [shape: c64[2,4,16,16], index: 0, kind: input, shape index: {}]
  %s1 = inlined_call_operand.vmem [shape: f32[2,4,16,16], index: 1, kind: output, shape index: {}]
  %s2 = scalar_lea.hbm %s0, 2048
  $region1: #{custom-call.1} parent=0
    #allocation0 [shape = 's32[1]{0}', space=sflag, size = 0x4, scoped, tag = 'scoped memory for custom-call.1']
    %3 = vsyncpa [#allocation0], 0
    %s4 = sshll.u32 %s1, 4
    %s5 = int_to_ptr.vmem [resolvable:$true] %s4
    %7 = dma.hbm_to_vmem [thread:$0]  %s2, 2048, %s5, [#allocation0]
    %8 = dma.done [#allocation0], 2048
    %9 = vsyncpa [#allocation0], 1

// kernel: custom-call
$region0: #{custom-call}
  %s0 = inlined_call_operand.hbm [shape: c64[2,4,16,16], index: 0, kind: input, shape index: {}]
  %s1 = inlined_call_operand.vmem [shape: f32[2,4,16,16], index: 1, kind: output, shape index: {}]
  $region1: #{custom-call} parent=0
    #allocation0 [shape = 's32[1]{0}', space=sflag, size = 0x4, scoped, tag = 'scoped memory for custom-call']
    %2 = vsyncpa [#allocation0], 0
    %s3 = sshll.u32 %s1, 4
    %s4 = int_to_ptr.vmem [resolvable:$true] %s3
    %6 = dma.hbm_to_vmem [thread:$0]  %s0, 2048, %s4, [#allocation0]
    %7 = dma.done [#allocation0], 2048
    %8 = vsyncpa [#allocation0], 1

// kernel: custom-call.2
$region0: #{custom-call.2}
  %s0 = inlined_call_operand.vmem [shape: f32[2,4,16,16], index: 0, kind: input, shape index: {}]
  %s1 = inlined_call_operand.vmem [shape: f32[2,4,16,16], index: 1, kind: input, shape index: {}]
  %s2 = inlined_call_operand.hbm [shape: c64[2,4,16,16], index: 2, kind: output, shape index: {}]
  %s3 = scalar_lea.hbm %s2, 2048
  $region1: #{custom-call.2} parent=0
    #allocation0 [shape = 's32[1]{0}', space=sflag, size = 0x4, scoped, tag = 'scoped memory for custom-call.2']
    %4 = vsyncpa [#allocation0], 0
    %s5 = sshll.u32 %s0, 4
    %s6 = int_to_ptr.vmem [resolvable:$true] %s5
    %8 = dma.vmem_to_hbm [thread:$0]  %s6, 2048, %s2, [#allocation0]
    %9 = dma.done [#allocation0], 2048
    %10 = vsyncpa [#allocation0], 1
  $region2: #{custom-call.2} parent=0
    #allocation1 [shape = 's32[1]{0}', space=sflag, size = 0x4, scoped, tag = 'scoped memory for custom-call.2']
    %11 = vsyncpa [#allocation1], 0
    %s12 = sshll.u32 %s1, 4
    %s13 = int_to_ptr.vmem [resolvable:$true] %s12
    %15 = dma.vmem_to_hbm [thread:$0]  %s13, 2048, %s3, [#allocation1]
    %16 = dma.done [#allocation1], 2048
    %17 = vsyncpa [#allocation1], 1

// kernel: freblock_forward.1
$region0: #{freblock_forward.1}
  #allocation0 [shape = 'u32[]', space=smem, size = 0x4, offset = 0x4, fixed_abs, tag = 'smem constant byte address 0x4 - core index']
  #allocation1 [shape = 'u32[144,128]{1,0:T(1,128)}', space=vmem, size = 0x12000, scoped, tag = 'internal scratch']
  %s0 = inlined_call_operand.vmem [shape: f32[2,4,256], index: 0, kind: input, shape index: {}]
  %s1 = inlined_call_operand.vmem [shape: f32[2,4,256], index: 1, kind: input, shape index: {}]
  %s2 = inlined_call_operand.vmem [shape: f32[4,4,4], index: 2, kind: input, shape index: {}]
  %s3 = inlined_call_operand.vmem [shape: f32[4,4,1], index: 3, kind: input, shape index: {}]
  %s4 = inlined_call_operand.vmem [shape: f32[2,4,256], index: 4, kind: output, shape index: {0}]
  %s5 = inlined_call_operand.vmem [shape: f32[2,4,256], index: 5, kind: output, shape index: {1}]
  %6 = xla_tuple %s4, %s5
  %s7 = sld [smem:[#allocation0]]
  $region57: #{freblock_forward.1} parent=0
    _
  %s9 = ssub.s32 1, %s7
  %s10 = scalar_select 0, %s9, %s7
  loop: start=0, step=1, limit=4
  $region2: #{freblock_forward.1} parent=0 // loop_pre_header
    _
  $region3: #{freblock_forward.1} parent=0 // loop_header
    %s12 = sphi 0, %s16
    %p13 = scmp.ge.s32.totalorder %s12, 4
    %s19 = sphi 0, %s31
    %s20 = sphi 0, %s27
    %s21 = sphi 0, %s19
    %s22 = sphi 0, %s20
    %s23 = sphi 0, %s21
    %s24 = sphi 0, %s22
    %s36 = sphi 0, %s38
    %s39 = sphi 0, %s36
    %s40 = sphi 0, %s39
    %s56 = sphi 0, %s40
    %s64 = sphi 0, %s66
    %s67 = sphi 0, %s64
    %s68 = sphi 0, %s67
    %s84 = sphi 0, %s68
    %s88 = sphi 0, %s88
    %s90 = sphi 0, %s88
    %s91 = sphi 0, %s90
    %s105 = sphi 0, %s91
    %s109 = sphi 0, %s109
    %s111 = sphi 0, %s109
    %s112 = sphi 0, %s111
    %s126 = sphi 0, %s112
    %s134 = sphi 0, %s136
    %s137 = sphi 0, %s134
    %s138 = sphi 0, %s137
    %s154 = sphi 0, %s138
    %s162 = sphi 0, %s164
    %s165 = sphi 0, %s162
    %s166 = sphi 0, %s165
    %s182 = sphi 0, %s166
  $region4: #{freblock_forward.1} parent=0 // loop_header_branch
    %15 = sbr.rel (%p13) target = $region8
  $region5: #{freblock_forward.1} parent=0 // loop_body
    %s17 = ssub.s32 %s12, 1
    %s18 = ssub.s32 %s12, 2
    %s25 = sadd.s32 1, %s20
    %p26 = scmp.ge.s32.totalorder %s25, 1
    %s27 = scalar_select %p26, 0, %s25
    %s28 = sadd.s32 1, %s19
    %s29 = scalar_select %p26, %s28, %s19
    %p30 = scmp.ge.s32.totalorder %s29, 2
    %s31 = scalar_select %p30, 0, %s29
    %s32 = ssub.s32 %s19, %s31
    %s33 = ssub.s32 %s20, %s27
    %s34 = sor.u32 %s32, %s33
    %p35 = scmp.eq.s32.totalorder %s34, 0
    %s37 = sadd.s32 %s36, 1
    %s38 = scalar_select %p35, %s36, %s37
    %p41 = pneg %p35
    %p42 = scmp.eq.s32.totalorder %s12, 1
    %p43 = por %p41, %p42
    %p44 = scmp.ne.s32.totalorder %s36, %s39
    %p45 = scmp.eq.s32.totalorder %s12, 0
    %p46 = por %p44, %p45
    %p47 = scmp.ne.s32.totalorder %s36, %s39
    %p48 = scmp.eq.s32.totalorder %s17, 1
    %p49 = por %p47, %p48
    %p50 = scmp.ne.s32.totalorder %s39, %s40
    %p51 = scmp.eq.s32.totalorder %s17, 0
    %p52 = por %p50, %p51
    %p53 = scmp.ne.s32.totalorder %s39, %s40
    %p54 = scmp.eq.s32.totalorder %s18, 1
    %p55 = por %p53, %p54
    %p57 = scmp.ne.s32.totalorder %s40, %s56
    %p58 = scmp.eq.s32.totalorder %s18, 0
    %p59 = por %p57, %p58
    %s60 = ssub.s32 %s19, %s31
    %s61 = ssub.s32 %s20, %s27
    %s62 = sor.u32 %s60, %s61
    %p63 = scmp.eq.s32.totalorder %s62, 0
    %s65 = sadd.s32 %s64, 1
    %s66 = scalar_select %p63, %s64, %s65
    %p69 = pneg %p63
    %p70 = scmp.eq.s32.totalorder %s12, 1
    %p71 = por %p69, %p70
    %p72 = scmp.ne.s32.totalorder %s64, %s67
    %p73 = scmp.eq.s32.totalorder %s12, 0
    %p74 = por %p72, %p73
    %p75 = scmp.ne.s32.totalorder %s64, %s67
    %p76 = scmp.eq.s32.totalorder %s17, 1
    %p77 = por %p75, %p76
    %p78 = scmp.ne.s32.totalorder %s67, %s68
    %p79 = scmp.eq.s32.totalorder %s17, 0
    %p80 = por %p78, %p79
    %p81 = scmp.ne.s32.totalorder %s67, %s68
    %p82 = scmp.eq.s32.totalorder %s18, 1
    %p83 = por %p81, %p82
    %p85 = scmp.ne.s32.totalorder %s68, %s84
    %p86 = scmp.eq.s32.totalorder %s18, 0
    %p87 = por %p85, %p86
    %s89 = sadd.s32 %s88, 1
    %p92 = scmp.eq.s32.totalorder %s12, 1
    %p93 = scmp.ne.s32.totalorder %s88, %s90
    %p94 = scmp.eq.s32.totalorder %s12, 0
    %p95 = por %p93, %p94
    %p96 = scmp.ne.s32.totalorder %s88, %s90
    %p97 = scmp.eq.s32.totalorder %s17, 1
    %p98 = por %p96, %p97
    %p99 = scmp.ne.s32.totalorder %s90, %s91
    %p100 = scmp.eq.s32.totalorder %s17, 0
    %p101 = por %p99, %p100
    %p102 = scmp.ne.s32.totalorder %s90, %s91
    %p103 = scmp.eq.s32.totalorder %s18, 1
    %p104 = por %p102, %p103
    %p106 = scmp.ne.s32.totalorder %s91, %s105
    %p107 = scmp.eq.s32.totalorder %s18, 0
    %p108 = por %p106, %p107
    %s110 = sadd.s32 %s109, 1
    %p113 = scmp.eq.s32.totalorder %s12, 1
    %p114 = scmp.ne.s32.totalorder %s109, %s111
    %p115 = scmp.eq.s32.totalorder %s12, 0
    %p116 = por %p114, %p115
    %p117 = scmp.ne.s32.totalorder %s109, %s111
    %p118 = scmp.eq.s32.totalorder %s17, 1
    %p119 = por %p117, %p118
    %p120 = scmp.ne.s32.totalorder %s111, %s112
    %p121 = scmp.eq.s32.totalorder %s17, 0
    %p122 = por %p120, %p121
    %p123 = scmp.ne.s32.totalorder %s111, %s112
    %p124 = scmp.eq.s32.totalorder %s18, 1
    %p125 = por %p123, %p124
    %p127 = scmp.ne.s32.totalorder %s112, %s126
    %p128 = scmp.eq.s32.totalorder %s18, 0
    %p129 = por %p127, %p128
    %s130 = ssub.s32 %s19, %s31
    %s131 = ssub.s32 %s20, %s27
    %s132 = sor.u32 %s130, %s131
    %p133 = scmp.eq.s32.totalorder %s132, 0
    %s135 = sadd.s32 %s134, 1
    %s136 = scalar_select %p133, %s134, %s135
    %p139 = pneg %p133
    %p140 = scmp.eq.s32.totalorder %s12, 1
    %p141 = por %p139, %p140
    %p142 = scmp.ne.s32.totalorder %s134, %s137
    %p143 = scmp.eq.s32.totalorder %s12, 0
    %p144 = por %p142, %p143
    %p145 = scmp.ne.s32.totalorder %s134, %s137
    %p146 = scmp.eq.s32.totalorder %s17, 1
    %p147 = por %p145, %p146
    %p148 = scmp.ne.s32.totalorder %s137, %s138
    %p149 = scmp.eq.s32.totalorder %s17, 0
    %p150 = por %p148, %p149
    %p151 = scmp.ne.s32.totalorder %s137, %s138
    %p152 = scmp.eq.s32.totalorder %s18, 1
    %p153 = por %p151, %p152
    %p155 = scmp.ne.s32.totalorder %s138, %s154
    %p156 = scmp.eq.s32.totalorder %s18, 0
    %p157 = por %p155, %p156
    %s158 = ssub.s32 %s19, %s31
    %s159 = ssub.s32 %s20, %s27
    %s160 = sor.u32 %s158, %s159
    %p161 = scmp.eq.s32.totalorder %s160, 0
    %s163 = sadd.s32 %s162, 1
    %s164 = scalar_select %p161, %s162, %s163
    %p167 = pneg %p161
    %p168 = scmp.eq.s32.totalorder %s12, 1
    %p169 = por %p167, %p168
    %p170 = scmp.ne.s32.totalorder %s162, %s165
    %p171 = scmp.eq.s32.totalorder %s12, 0
    %p172 = por %p170, %p171
    %p173 = scmp.ne.s32.totalorder %s162, %s165
    %p174 = scmp.eq.s32.totalorder %s17, 1
    %p175 = por %p173, %p174
    %p176 = scmp.ne.s32.totalorder %s165, %s166
    %p177 = scmp.eq.s32.totalorder %s17, 0
    %p178 = por %p176, %p177
    %p179 = scmp.ne.s32.totalorder %s165, %s166
    %p180 = scmp.eq.s32.totalorder %s18, 1
    %p181 = por %p179, %p180
    %p183 = scmp.ne.s32.totalorder %s166, %s182
    %p184 = scmp.eq.s32.totalorder %s18, 0
    %p185 = por %p183, %p184
    %p186 = scmp.le.s32.totalorder 1, %s12
    %p187 = scmp.lt.s32.totalorder %s12, 3
    %p188 = pnand %p186, %p187
    %p189 = pneg %p188
    // Predicated region
    $region9: #{freblock_forward.1} parent=5 // pred_check
      _
    $region10: #{freblock_forward.1} parent=5 // pred_check_branch
      %191 = sbr.rel (%p188) target = $region12
    $region11: #{freblock_forward.1} parent=5 // pred_region
      %s192 = ssub.s32 %s12, 1
      // Predicated region
      $region13: #{freblock_forward.1} parent=11 // pred_check
        %p193 = pneg %p101
      $region14: #{freblock_forward.1} parent=11 // pred_check_branch
        %195 = sbr.rel (%p193) target = $region16
      $region15: #{freblock_forward.1} parent=11 // pred_region
        _
      $region16: #{freblock_forward.1} parent=11 // pred_fallthru
        _
      // Predicated region
      $region17: #{freblock_forward.1} parent=11 // pred_check
        %p196 = pneg %p122
      $region18: #{freblock_forward.1} parent=11 // pred_check_branch
        %198 = sbr.rel (%p196) target = $region20
      $region19: #{freblock_forward.1} parent=11 // pred_region
        _
      $region20: #{freblock_forward.1} parent=11 // pred_fallthru
        _
    $region12: #{freblock_forward.1} parent=5 // pred_fallthru
      _
    %p199 = scmp.lt.s32.totalorder %s12, 2
    // Predicated region
    $region21: #{freblock_forward.1} parent=5 // pred_check
      %p200 = pneg %p199
    $region22: #{freblock_forward.1} parent=5 // pred_check_branch
      %202 = sbr.rel (%p200) target = $region24
    $region23: #{freblock_forward.1} parent=5 // pred_region
      // Predicated region
      $region25: #{freblock_forward.1} parent=23 // pred_check
        %p203 = pneg %p46
      $region26: #{freblock_forward.1} parent=23 // pred_check_branch
        %205 = sbr.rel (%p203) target = $region28
      $region27: #{freblock_forward.1} parent=23 // pred_region
        %s206 = smul.u32 2, %s20
        %p207 = scmp.lt.s32.totalorder %s19, 1
        %s208 = scalar_select %p207, %s19, 1
        %p209 = scmp.lt.s32.totalorder %s206, 1
        %s210 = scalar_select %p209, %s206, 1
        %s211 = smul.addr %s208, 2
        %s212 = sadd.s32 %s210, %s211
        %s213 = smul.addr %s212, 4
        %s214 = scalar_lea.vmem %s0, %s213
        %s215 = smul.u32 2, %s20
      $region28: #{freblock_forward.1} parent=23 // pred_fallthru
        _
      // Predicated region
      $region29: #{freblock_forward.1} parent=23 // pred_check
        %p216 = pneg %p74
      $region30: #{freblock_forward.1} parent=23 // pred_check_branch
        %218 = sbr.rel (%p216) target = $region32
      $region31: #{freblock_forward.1} parent=23 // pred_region
        %s219 = smul.u32 2, %s20
        %p220 = scmp.lt.s32.totalorder %s19, 1
        %s221 = scalar_select %p220, %s19, 1
        %p222 = scmp.lt.s32.totalorder %s219, 1
        %s223 = scalar_select %p222, %s219, 1
        %s224 = smul.addr %s221, 2
        %s225 = sadd.s32 %s223, %s224
        %s226 = smul.addr %s225, 4
        %s227 = scalar_lea.vmem %s1, %s226
        %s228 = smul.u32 2, %s20
      $region32: #{freblock_forward.1} parent=23 // pred_fallthru
        _
    $region24: #{freblock_forward.1} parent=5 // pred_fallthru
      _
    %p229 = scmp.le.s32.totalorder 1, %s12
    %p230 = scmp.lt.s32.totalorder %s12, 3
    %p231 = pnand %p229, %p230
    %p232 = pneg %p231
    // Predicated region
    $region33: #{freblock_forward.1} parent=5 // pred_check
      _
    $region34: #{freblock_forward.1} parent=5 // pred_check_branch
      %234 = sbr.rel (%p231) target = $region36
    $region35: #{freblock_forward.1} parent=5 // pred_region
      %s235 = ssub.s32 %s12, 1
      %s236 = smul.u32 2, %s22
      %p237 = scmp.lt.s32.totalorder %s21, 1
      %s238 = scalar_select %p237, %s21, 1
      %p239 = scmp.lt.s32.totalorder %s236, 1
      %s240 = scalar_select %p239, %s236, 1
      %s241 = smul.addr %s238, 2
      %s242 = sadd.s32 %s240, %s241
      %s243 = smul.addr %s242, 4
      %s244 = scalar_lea.vmem %s0, %s243
      %p245 = pneg %p52
      %p246 = pneg %p49
      %s247 = smul.u32 2, %s22
      %p248 = scmp.lt.s32.totalorder %s21, 1
      %s249 = scalar_select %p248, %s21, 1
      %p250 = scmp.lt.s32.totalorder %s247, 1
      %s251 = scalar_select %p250, %s247, 1
      %s252 = smul.addr %s249, 2
      %s253 = sadd.s32 %s251, %s252
      %s254 = smul.addr %s253, 4
      %s255 = scalar_lea.vmem %s1, %s254
      %p256 = pneg %p80
      %p257 = pneg %p77
      %p258 = pneg %p101
      %p259 = pneg %p98
      %p260 = pneg %p122
      %p261 = pneg %p119
      %p262 = pneg %p150
      %p263 = pneg %p147
      %s264 = smul.u32 2, %s22
      %p265 = scmp.lt.s32.totalorder %s21, 1
      %s266 = scalar_select %p265, %s21, 1
      %p267 = scmp.lt.s32.totalorder %s264, 1
      %s268 = scalar_select %p267, %s264, 1
      %s269 = smul.addr %s266, 2
      %s270 = sadd.s32 %s268, %s269
      %s271 = smul.addr %s270, 4
      %s272 = scalar_lea.vmem %s4, %s271
      %p273 = pneg %p178
      %p274 = pneg %p175
      %s275 = smul.u32 2, %s22
      %p276 = scmp.lt.s32.totalorder %s21, 1
      %s277 = scalar_select %p276, %s21, 1
      %p278 = scmp.lt.s32.totalorder %s275, 1
      %s279 = scalar_select %p278, %s275, 1
      %s280 = smul.addr %s277, 2
      %s281 = sadd.s32 %s279, %s280
      %s282 = smul.addr %s281, 4
      %s283 = scalar_lea.vmem %s5, %s282
      %s284 = smul.u32 2, %s22
      %p285 = scmp.lt.s32.totalorder %s21, 1
      %s286 = scalar_select %p285, %s21, 1
      %p287 = scmp.lt.s32.totalorder %s284, 1
      %s288 = scalar_select %p287, %s284, 1
      %s289 = smul.addr %s286, 2
      %s290 = sadd.s32 %s288, %s289
      %s291 = smul.addr %s290, 4
      %s292 = scalar_lea.vmem %s0, %s291
      %s293 = smul.u32 2, %s22
      %s294 = smul.u32 2, %s22
      %p295 = scmp.lt.s32.totalorder %s21, 1
      %s296 = scalar_select %p295, %s21, 1
      %p297 = scmp.lt.s32.totalorder %s294, 1
      %s298 = scalar_select %p297, %s294, 1
      %s299 = smul.addr %s296, 2
      %s300 = sadd.s32 %s298, %s299
      %s301 = smul.addr %s300, 4
      %s302 = scalar_lea.vmem %s1, %s301
      %s303 = smul.u32 2, %s22
      %s304 = smul.u32 2, %s22
      %p305 = scmp.lt.s32.totalorder %s21, 1
      %s306 = scalar_select %p305, %s21, 1
      %p307 = scmp.lt.s32.totalorder %s304, 1
      %s308 = scalar_select %p307, %s304, 1
      %s309 = smul.addr %s306, 2
      %s310 = sadd.s32 %s308, %s309
      %s311 = smul.addr %s310, 4
      %s312 = scalar_lea.vmem %s4, %s311
      %s313 = smul.u32 2, %s22
      %s314 = smul.u32 2, %s22
      %p315 = scmp.lt.s32.totalorder %s21, 1
      %s316 = scalar_select %p315, %s21, 1
      %p317 = scmp.lt.s32.totalorder %s314, 1
      %s318 = scalar_select %p317, %s314, 1
      %s319 = smul.addr %s316, 2
      %s320 = sadd.s32 %s318, %s319
      %s321 = smul.addr %s320, 4
      %s322 = scalar_lea.vmem %s5, %s321
      %s323 = smul.u32 2, %s22
      %v324 = vld [vmem:[%s292] sm:$0xff]
      %v325 = vld [vmem:[%s302] sm:$0xff]
      %v326 = vld [vmem:[%s2] sm:$0xf]
      %v327 = vld [vmem:[%s2 + $0x4] sm:$0xf]
      %v328 = vld [vmem:[%s2 + $0x8] sm:$0xf]
      %v329 = vld [vmem:[%s2 + $0xc] sm:$0xf]
      %v330 = vld [vmem:[%s3] sm:$0xf]
      %v331 = vld [vmem:[%s3 + $0x4] sm:$0xf]
      %v332 = vld [vmem:[%s3 + $0x8] sm:$0xf]
      %v333 = vld [vmem:[%s3 + $0xc] sm:$0xf]
      %v334 = vmul.f32 %v324, %v324
      %v335 = vmul.f32 %v325, %v325
      %v336 = vadd.f32 %v334, %v335
      %v337 = vrsqrt.pop %v336
      %v338 = vmul.f32 %v336, %v337
      %vm339 = vcmp.eq.f32.partialorder %v336, inf
      %v340 = vsel %vm339, %v336, %v338
      %vm341 = vcmp.eq.f32.partialorder %v336, 0.0
      %v342 = vand.u32 %v336, 2147483648
      %v343 = vsel %vm341, %v342, %v340
      %v344 = vand.u32 2147483647, %v324
      %v345 = vand.u32 2147483647, %v325
      %v346 = vmin.f32 %v344, %v345
      %v347 = vmax.f32 %v344, %v345
      %v348 = vrcp.pop %v347
      %v349 = vmul.f32 %v346, %v348
      %v350 = vmul.f32 %v349, %v349
      %v351 = vmul.f32 0.002785687, %v350
      %v352 = vadd.f32 %v351, -0.015866
      %v353 = vmul.f32 %v352, %v350
      %v354 = vadd.f32 %v353, 0.04247222
      %v355 = vmul.f32 %v354, %v350
      %v356 = vadd.f32 %v355, -0.074975304
      %v357 = vmul.f32 %v356, %v350
      %v358 = vadd.f32 %v357, 0.1064488
      %v359 = vmul.f32 %v358, %v350
      %v360 = vadd.f32 %v359, -0.14207031
      %v361 = vmul.f32 %v360, %v350
      %v362 = vadd.f32 %v361, 0.19993454
      %v363 = vmul.f32 %v362, %v350
      %v364 = vadd.f32 %v363, -0.33333147
      %v365 = vmul.f32 %v364, %v350
      %v366 = vmul.f32 %v365, %v349
      %v367 = vadd.f32 %v366, %v349
      %vm368 = vcmp.gt.f32.partialorder %v345, %v344
      %v369 = vsub.f32 1.5707964, %v367
      %v370 = vsel %vm368, %v369, %v367
      %vm371 = vcmp.lt.f32.partialorder %v324, 0.0
      %v372 = vsub.f32 3.1415927, %v370
      %v373 = vsel %vm371, %v372, %v370
      %vm374 = vcmp.lt.s32.totalorder %v324, 0
      %v375 = vsel %vm374, 3.1415927, 0.0
      %vm376 = vcmp.eq.f32.partialorder %v325, 0.0
      %v377 = vsel %vm376, %v375, %v373
      %vm378 = vcmp.ne.f32.partialorder %v324, %v324
      %vm379 = vcmp.ne.f32.partialorder %v325, %v325
      %vm380 = vmor %vm378, %vm379
      %v381 = vsel %vm380, nan, %v377
      %vm382 = vcmp.lt.f32.partialorder %v324, 0.0
      %v383 = vsel %vm382, 2.3561945, 0.7853982
      %vm384 = vcmp.eq.s32.totalorder %v344, inf
      %vm385 = vcmp.eq.s32.totalorder %v345, inf
      %vm386 = vmand %vm384, %vm385
      %v387 = vsel %vm386, %v383, %v381
      %v388 = vand.u32 2147483647, %v387
      %v389 = vand.u32 %v325, 2147483648
      %v390 = vor.u32 %v388, %v389
      %392 = vset.pattern.permute.xlu0 0
      %393 = vperm.xlu0 %392, %v326
      %v394 = vpop.permute.xlu0 %393
      %v397 = vlaneseq
      %v398 = vshrl.u32 %v397, 7
      %v399 = vsub.s32 0, %v398
      %v400 = vrot.slane %v343, %v399
      %v401 = vlaneseq
      %v402 = vshrl.u32 %v401, 7
      %v403 = vsub.s32 4, %v402
      %v404 = vrot.slane %v343, %v403
      %v407 = vlaneseq
      %v408 = vshrl.u32 %v407, 7
      %v409 = vsub.s32 0, %v408
      %v410 = vrot.slane %v400, %v409
      %v411 = vlaneseq
      %v412 = vshrl.u32 %v411, 7
      %v413 = vsub.s32 0, %v412
      %v414 = vrot.slane %v404, %v413
      %v415 = vmul.f32 %v394, %v410
      %v416 = vmul.f32 %v394, %v414
      %417 = vset.pattern.permute.xlu0 1
      %418 = vperm.xlu0 %417, %v326
      %v419 = vpop.permute.xlu0 %418
      %v421 = vlaneseq
      %v422 = vshrl.u32 %v421, 7
      %v423 = vsub.s32 1, %v422
      %v424 = vrot.slane %v343, %v423
      %v425 = vlaneseq
      %v426 = vshrl.u32 %v425, 7
      %v427 = vsub.s32 5, %v426
      %v428 = vrot.slane %v343, %v427
      %v431 = vlaneseq
      %v432 = vshrl.u32 %v431, 7
      %v433 = vsub.s32 1, %v432
      %v434 = vrot.slane %v424, %v433
      %v435 = vlaneseq
      %v436 = vshrl.u32 %v435, 7
      %v437 = vsub.s32 1, %v436
      %v438 = vrot.slane %v428, %v437
      %v439 = vmul.f32 %v419, %v434
      %v440 = vmul.f32 %v419, %v438
      %v441 = vadd.f32 %v415, %v439
      %v442 = vadd.f32 %v416, %v440
      %443 = vset.pattern.permute.xlu0 2
      %444 = vperm.xlu0 %443, %v326
      %v445 = vpop.permute.xlu0 %444
      %v447 = vlaneseq
      %v448 = vshrl.u32 %v447, 7
      %v449 = vsub.s32 2, %v448
      %v450 = vrot.slane %v343, %v449
      %v451 = vlaneseq
      %v452 = vshrl.u32 %v451, 7
      %v453 = vsub.s32 6, %v452
      %v454 = vrot.slane %v343, %v453
      %v457 = vlaneseq
      %v458 = vshrl.u32 %v457, 7
      %v459 = vsub.s32 2, %v458
      %v460 = vrot.slane %v450, %v459
      %v461 = vlaneseq
      %v462 = vshrl.u32 %v461, 7
      %v463 = vsub.s32 2, %v462
      %v464 = vrot.slane %v454, %v463
      %v465 = vmul.f32 %v445, %v460
      %v466 = vmul.f32 %v445, %v464
      %v467 = vadd.f32 %v441, %v465
      %v468 = vadd.f32 %v442, %v466
      %469 = vset.pattern.permute.xlu0 3
      %470 = vperm.xlu0 %469, %v326
      %v471 = vpop.permute.xlu0 %470
      %v473 = vlaneseq
      %v474 = vshrl.u32 %v473, 7
      %v475 = vsub.s32 3, %v474
      %v476 = vrot.slane %v343, %v475
      %v477 = vlaneseq
      %v478 = vshrl.u32 %v477, 7
      %v479 = vsub.s32 7, %v478
      %v480 = vrot.slane %v343, %v479
      %v483 = vlaneseq
      %v484 = vshrl.u32 %v483, 7
      %v485 = vsub.s32 3, %v484
      %v486 = vrot.slane %v476, %v485
      %v487 = vlaneseq
      %v488 = vshrl.u32 %v487, 7
      %v489 = vsub.s32 3, %v488
      %v490 = vrot.slane %v480, %v489
      %v491 = vmul.f32 %v471, %v486
      %v492 = vmul.f32 %v471, %v490
      %v493 = vadd.f32 %v467, %v491
      %v494 = vadd.f32 %v468, %v492
      %496 = vset.pattern.permute.xlu0 0
      %497 = vperm.xlu0 %496, %v330
      %v498 = vpop.permute.xlu0 %497
      %v500 = vadd.f32 %v493, %v498
      %v501 = vadd.f32 %v494, %v498
      %vm502 = vcmp.ge.f32.partialorder %v500, 0.0
      %vm503 = vcmp.ge.f32.partialorder %v501, 0.0
      %v504 = vmul.f32 %v500, 0.1
      %v505 = vmul.f32 %v501, 0.1
      %v506 = vsel %vm502, %v500, %v504
      %v507 = vsel %vm503, %v501, %v505
      %509 = vset.pattern.permute.xlu0 0
      %510 = vperm.xlu0 %509, %v327
      %v511 = vpop.permute.xlu0 %510
      %v513 = vlaneseq
      %v514 = vshrl.u32 %v513, 7
      %v515 = vsub.s32 0, %v514
      %v516 = vrot.slane %v506, %v515
      %v517 = vlaneseq
      %v518 = vshrl.u32 %v517, 7
      %v519 = vsub.s32 0, %v518
      %v520 = vrot.slane %v507, %v519
      %v521 = vmul.f32 %v511, %v516
      %v522 = vmul.f32 %v511, %v520
      %523 = vset.pattern.permute.xlu0 1
      %524 = vperm.xlu0 %523, %v327
      %v525 = vpop.permute.xlu0 %524
      %v527 = vlaneseq
      %v528 = vshrl.u32 %v527, 7
      %v529 = vsub.s32 1, %v528
      %v530 = vrot.slane %v506, %v529
      %v531 = vlaneseq
      %v532 = vshrl.u32 %v531, 7
      %v533 = vsub.s32 1, %v532
      %v534 = vrot.slane %v507, %v533
      %v535 = vmul.f32 %v525, %v530
      %v536 = vmul.f32 %v525, %v534
      %v537 = vadd.f32 %v521, %v535
      %v538 = vadd.f32 %v522, %v536
      %539 = vset.pattern.permute.xlu0 2
      %540 = vperm.xlu0 %539, %v327
      %v541 = vpop.permute.xlu0 %540
      %v543 = vlaneseq
      %v544 = vshrl.u32 %v543, 7
      %v545 = vsub.s32 2, %v544
      %v546 = vrot.slane %v506, %v545
      %v547 = vlaneseq
      %v548 = vshrl.u32 %v547, 7
      %v549 = vsub.s32 2, %v548
      %v550 = vrot.slane %v507, %v549
      %v551 = vmul.f32 %v541, %v546
      %v552 = vmul.f32 %v541, %v550
      %v553 = vadd.f32 %v537, %v551
      %v554 = vadd.f32 %v538, %v552
      %555 = vset.pattern.permute.xlu0 3
      %556 = vperm.xlu0 %555, %v327
      %v557 = vpop.permute.xlu0 %556
      %v559 = vlaneseq
      %v560 = vshrl.u32 %v559, 7
      %v561 = vsub.s32 3, %v560
      %v562 = vrot.slane %v506, %v561
      %v563 = vlaneseq
      %v564 = vshrl.u32 %v563, 7
      %v565 = vsub.s32 3, %v564
      %v566 = vrot.slane %v507, %v565
      %v567 = vmul.f32 %v557, %v562
      %v568 = vmul.f32 %v557, %v566
      %v569 = vadd.f32 %v553, %v567
      %v570 = vadd.f32 %v554, %v568
      %572 = vset.pattern.permute.xlu0 0
      %573 = vperm.xlu0 %572, %v331
      %v574 = vpop.permute.xlu0 %573
      %v576 = vadd.f32 %v569, %v574
      %v577 = vadd.f32 %v570, %v574
      %579 = vset.pattern.permute.xlu0 0
      %580 = vperm.xlu0 %579, %v328
      %v581 = vpop.permute.xlu0 %580
      %v584 = vlaneseq
      %v585 = vshrl.u32 %v584, 7
      %v586 = vsub.s32 0, %v585
      %v587 = vrot.slane %v390, %v586
      %v588 = vlaneseq
      %v589 = vshrl.u32 %v588, 7
      %v590 = vsub.s32 4, %v589
      %v591 = vrot.slane %v390, %v590
      %v594 = vlaneseq
      %v595 = vshrl.u32 %v594, 7
      %v596 = vsub.s32 0, %v595
      %v597 = vrot.slane %v587, %v596
      %v598 = vlaneseq
      %v599 = vshrl.u32 %v598, 7
      %v600 = vsub.s32 0, %v599
      %v601 = vrot.slane %v591, %v600
      %v602 = vmul.f32 %v581, %v597
      %v603 = vmul.f32 %v581, %v601
      %604 = vset.pattern.permute.xlu0 1
      %605 = vperm.xlu0 %604, %v328
      %v606 = vpop.permute.xlu0 %605
      %v608 = vlaneseq
      %v609 = vshrl.u32 %v608, 7
      %v610 = vsub.s32 1, %v609
      %v611 = vrot.slane %v390, %v610
      %v612 = vlaneseq
      %v613 = vshrl.u32 %v612, 7
      %v614 = vsub.s32 5, %v613
      %v615 = vrot.slane %v390, %v614
      %v618 = vlaneseq
      %v619 = vshrl.u32 %v618, 7
      %v620 = vsub.s32 1, %v619
      %v621 = vrot.slane %v611, %v620
      %v622 = vlaneseq
      %v623 = vshrl.u32 %v622, 7
      %v624 = vsub.s32 1, %v623
      %v625 = vrot.slane %v615, %v624
      %v626 = vmul.f32 %v606, %v621
      %v627 = vmul.f32 %v606, %v625
      %v628 = vadd.f32 %v602, %v626
      %v629 = vadd.f32 %v603, %v627
      %630 = vset.pattern.permute.xlu0 2
      %631 = vperm.xlu0 %630, %v328
      %v632 = vpop.permute.xlu0 %631
      %v634 = vlaneseq
      %v635 = vshrl.u32 %v634, 7
      %v636 = vsub.s32 2, %v635
      %v637 = vrot.slane %v390, %v636
      %v638 = vlaneseq
      %v639 = vshrl.u32 %v638, 7
      %v640 = vsub.s32 6, %v639
      %v641 = vrot.slane %v390, %v640
      %v644 = vlaneseq
      %v645 = vshrl.u32 %v644, 7
      %v646 = vsub.s32 2, %v645
      %v647 = vrot.slane %v637, %v646
      %v648 = vlaneseq
      %v649 = vshrl.u32 %v648, 7
      %v650 = vsub.s32 2, %v649
      %v651 = vrot.slane %v641, %v650
      %v652 = vmul.f32 %v632, %v647
      %v653 = vmul.f32 %v632, %v651
      %v654 = vadd.f32 %v628, %v652
      %v655 = vadd.f32 %v629, %v653
      %656 = vset.pattern.permute.xlu0 3
      %657 = vperm.xlu0 %656, %v328
      %v658 = vpop.permute.xlu0 %657
      %v660 = vlaneseq
      %v661 = vshrl.u32 %v660, 7
      %v662 = vsub.s32 3, %v661
      %v663 = vrot.slane %v390, %v662
      %v664 = vlaneseq
      %v665 = vshrl.u32 %v664, 7
      %v666 = vsub.s32 7, %v665
      %v667 = vrot.slane %v390, %v666
      %v670 = vlaneseq
      %v671 = vshrl.u32 %v670, 7
      %v672 = vsub.s32 3, %v671
      %v673 = vrot.slane %v663, %v672
      %v674 = vlaneseq
      %v675 = vshrl.u32 %v674, 7
      %v676 = vsub.s32 3, %v675
      %v677 = vrot.slane %v667, %v676
      %v678 = vmul.f32 %v658, %v673
      %v679 = vmul.f32 %v658, %v677
      %v680 = vadd.f32 %v654, %v678
      %v681 = vadd.f32 %v655, %v679
      %683 = vset.pattern.permute.xlu0 0
      %684 = vperm.xlu0 %683, %v332
      %v685 = vpop.permute.xlu0 %684
      %v687 = vadd.f32 %v680, %v685
      %v688 = vadd.f32 %v681, %v685
      %vm689 = vcmp.ge.f32.partialorder %v687, 0.0
      %vm690 = vcmp.ge.f32.partialorder %v688, 0.0
      %v691 = vmul.f32 %v687, 0.1
      %v692 = vmul.f32 %v688, 0.1
      %v693 = vsel %vm689, %v687, %v691
      %v694 = vsel %vm690, %v688, %v692
      %696 = vset.pattern.permute.xlu0 0
      %697 = vperm.xlu0 %696, %v329
      %v698 = vpop.permute.xlu0 %697
      %v700 = vlaneseq
      %v701 = vshrl.u32 %v700, 7
      %v702 = vsub.s32 0, %v701
      %v703 = vrot.slane %v693, %v702
      %v704 = vlaneseq
      %v705 = vshrl.u32 %v704, 7
      %v706 = vsub.s32 0, %v705
      %v707 = vrot.slane %v694, %v706
      %v708 = vmul.f32 %v698, %v703
      %v709 = vmul.f32 %v698, %v707
      %710 = vset.pattern.permute.xlu0 1
      %711 = vperm.xlu0 %710, %v329
      %v712 = vpop.permute.xlu0 %711
      %v714 = vlaneseq
      %v715 = vshrl.u32 %v714, 7
      %v716 = vsub.s32 1, %v715
      %v717 = vrot.slane %v693, %v716
      %v718 = vlaneseq
      %v719 = vshrl.u32 %v718, 7
      %v720 = vsub.s32 1, %v719
      %v721 = vrot.slane %v694, %v720
      %v722 = vmul.f32 %v712, %v717
      %v723 = vmul.f32 %v712, %v721
      %v724 = vadd.f32 %v708, %v722
      %v725 = vadd.f32 %v709, %v723
      %726 = vset.pattern.permute.xlu0 2
      %727 = vperm.xlu0 %726, %v329
      %v728 = vpop.permute.xlu0 %727
      %v730 = vlaneseq
      %v731 = vshrl.u32 %v730, 7
      %v732 = vsub.s32 2, %v731
      %v733 = vrot.slane %v693, %v732
      %v734 = vlaneseq
      %v735 = vshrl.u32 %v734, 7
      %v736 = vsub.s32 2, %v735
      %v737 = vrot.slane %v694, %v736
      %v738 = vmul.f32 %v728, %v733
      %v739 = vmul.f32 %v728, %v737
      %v740 = vadd.f32 %v724, %v738
      %v741 = vadd.f32 %v725, %v739
      %742 = vset.pattern.permute.xlu0 3
      %743 = vperm.xlu0 %742, %v329
      %v744 = vpop.permute.xlu0 %743
      %v746 = vlaneseq
      %v747 = vshrl.u32 %v746, 7
      %v748 = vsub.s32 3, %v747
      %v749 = vrot.slane %v693, %v748
      %v750 = vlaneseq
      %v751 = vshrl.u32 %v750, 7
      %v752 = vsub.s32 3, %v751
      %v753 = vrot.slane %v694, %v752
      %v754 = vmul.f32 %v744, %v749
      %v755 = vmul.f32 %v744, %v753
      %v756 = vadd.f32 %v740, %v754
      %v757 = vadd.f32 %v741, %v755
      %759 = vset.pattern.permute.xlu0 0
      %760 = vperm.xlu0 %759, %v333
      %v761 = vpop.permute.xlu0 %760
      %v763 = vadd.f32 %v756, %v761
      %v764 = vadd.f32 %v757, %v761
      %v765 = vand.u32 2147483647, %v763
      %vm766 = vcmp.le.f32.partialorder %v765, 0.7853982
      %vm767 = vcmp.lt.s32.totalorder %v763, 0
      %v768 = vand.u32 %v763, 2139095040
      %v769 = vshrl.u32 %v768, 23
      %v770 = vsub.s32 %v769, 127
      %v771 = vand.u32 2147483647, %v763
      %v772 = vand.u32 %v771, 8388607
      %v773 = vor.u32 %v772, 8388608
      %v774 = vsub.s32 0, %v773
      %v775 = vadd.s32 %v770, 1
      %vm776 = vcmp.gt.s32.totalorder %v775, 0
      %v777 = vsel %vm776, %v775, 0
      %v778 = vshrl.u32 %v777, 5
      %v779 = vand.u32 %v777, 31
      %v780 = vsub.s32 32, %v779
      %v781 = vshrl.u32 683565275, %v780
      %v782 = vshll.u32 683565275, %v779
      %v783 = vshrl.u32 2475754826, %v780
      %v784 = vor.u32 %v782, %v783
      %v785 = vshll.u32 2475754826, %v779
      %v786 = vshrl.u32 2131351028, %v780
      %v787 = vor.u32 %v785, %v786
      %v788 = vshll.u32 2131351028, %v779
      %v789 = vshrl.u32 2102212464, %v780
      %v790 = vor.u32 %v788, %v789
      %v791 = vshll.u32 2102212464, %v779
      %v792 = vshrl.u32 920167782, %v780
      %v793 = vor.u32 %v791, %v792
      %v794 = vshll.u32 920167782, %v779
      %v795 = vshrl.u32 1326507024, %v780
      %v796 = vor.u32 %v794, %v795
      %vm797 = vcmp.lt.s32.totalorder %v778, 1
      %vm798 = vcmp.lt.s32.totalorder %v778, 2
      %vm799 = vcmp.lt.s32.totalorder %v778, 3
      %vm800 = vcmp.lt.s32.totalorder %v778, 4
      %v801 = vsel %vm797, %v781, %v784
      %v802 = vsel %vm800, %v790, 2102212464
      %v803 = vsel %vm799, %v787, %v802
      %v804 = vsel %vm798, %v801, %v803
      %v805 = vsel %vm797, %v784, %v787
      %v806 = vsel %vm800, %v793, 920167782
      %v807 = vsel %vm799, %v790, %v806
      %v808 = vsel %vm798, %v805, %v807
      %v809 = vsel %vm797, %v787, %v790
      %v810 = vsel %vm800, %v796, 1326507024
      %v811 = vsel %vm799, %v793, %v810
      %v812 = vsel %vm798, %v809, %v811
      %v813 = vshll.u32 %v773, 8
      %v814 = vmul.u32.u64.compose %v813, %v812
      %v815 = vextract.low.u32 %v814
      %v816 = vextract.high.u32 %v814
      %v817 = vmul.u32.u64.compose %v813, %v808
      %v818 = vextract.low.u32 %v817
      %v819 = vextract.high.u32 %v817
      %v820 = vmul.u32 %v813, %v804
      %v821 = vadd.s32 %v816, %v818
      %vm822 = vc.u32 %v816, %v818
      %v823 = vadd.s32 %v819, 1
      %v824 = vsel %vm822, %v823, %v819
      %v825 = vadd.s32 %v820, %v824
      %v826 = vadd.s32 %v825, 536870912
      %v827 = vshrl.u32 %v826, 30
      %v828 = vshll.u32 %v827, 30
      %v829 = vsub.s32 %v825, %v828
      %vm830 = vcmp.lt.s32.totalorder %v829, 0
      %v831 = vsub.s32 0, %v829
      %v832 = vsel %vm830, %v831, %v829
      %v833 = vclz %v832
      %v834 = vsub.s32 %v833, 2
      %vm835 = vcmp.gt.s32.totalorder 0, %v834
      %v836 = vsel %vm835, 0, %v834
      %v837 = vsub.s32 32, %v836
      %v838 = vshll.u32 %v829, %v836
      %v839 = vshrl.u32 %v821, %v837
      %v840 = vor.u32 %v838, %v839
      %v841 = vsub.s32 4294967266, %v836
      %v842 = vadd.s32 %v841, 127
      %v843 = vshll.u32 %v842, 23
      %v844 = vor.u32 4788187, %v843
      %v845 = vand.u32 2147483647, %v844
      %v847 = vcvt.s32.f32 %v840
      %v848 = vmul.f32 %v847, %v845
      %v849 = vxor.u32 %v848, 2147483648
      %v850 = vsel %vm767, %v849, %v848
      %v851 = vsub.s32 4, %v827
      %v852 = vsel %vm767, %v851, %v827
      %v853 = vsel %vm766, %v763, %v850
      %v854 = vsel %vm766, 0, %v852
      %v855 = vcosq.f32.pop %v853
      %v856 = vsinq.f32.pop %v853
      %vm857 = vweird.f32 %v763
      %v858 = vand.u32 %v854, 3
      %vm859 = vcmp.lt.s32.totalorder %v858, 2
      %vm860 = vcmp.eq.s32.totalorder %v858, 0
      %v861 = vxor.u32 %v856, 2147483648
      %v862 = vsel %vm860, %v855, %v861
      %vm863 = vcmp.eq.s32.totalorder %v858, 2
      %v864 = vxor.u32 %v855, 2147483648
      %v865 = vsel %vm863, %v864, %v856
      %v866 = vsel %vm859, %v862, %v865
      %v867 = vsel %vm857, nan, %v866
      %v868 = vand.u32 2147483647, %v764
      %vm869 = vcmp.le.f32.partialorder %v868, 0.7853982
      %vm870 = vcmp.lt.s32.totalorder %v764, 0
      %v871 = vand.u32 %v764, 2139095040
      %v872 = vshrl.u32 %v871, 23
      %v873 = vsub.s32 %v872, 127
      %v874 = vand.u32 2147483647, %v764
      %v875 = vand.u32 %v874, 8388607
      %v876 = vor.u32 %v875, 8388608
      %v877 = vsub.s32 0, %v876
      %v878 = vadd.s32 %v873, 1
      %vm879 = vcmp.gt.s32.totalorder %v878, 0
      %v880 = vsel %vm879, %v878, 0
      %v881 = vshrl.u32 %v880, 5
      %v882 = vand.u32 %v880, 31
      %v883 = vsub.s32 32, %v882
      %v884 = vshrl.u32 683565275, %v883
      %v885 = vshll.u32 683565275, %v882
      %v886 = vshrl.u32 2475754826, %v883
      %v887 = vor.u32 %v885, %v886
      %v888 = vshll.u32 2475754826, %v882
      %v889 = vshrl.u32 2131351028, %v883
      %v890 = vor.u32 %v888, %v889
      %v891 = vshll.u32 2131351028, %v882
      %v892 = vshrl.u32 2102212464, %v883
      %v893 = vor.u32 %v891, %v892
      %v894 = vshll.u32 2102212464, %v882
      %v895 = vshrl.u32 920167782, %v883
      %v896 = vor.u32 %v894, %v895
      %v897 = vshll.u32 920167782, %v882
      %v898 = vshrl.u32 1326507024, %v883
      %v899 = vor.u32 %v897, %v898
      %vm900 = vcmp.lt.s32.totalorder %v881, 1
      %vm901 = vcmp.lt.s32.totalorder %v881, 2
      %vm902 = vcmp.lt.s32.totalorder %v881, 3
      %vm903 = vcmp.lt.s32.totalorder %v881, 4
      %v904 = vsel %vm900, %v884, %v887
      %v905 = vsel %vm903, %v893, 2102212464
      %v906 = vsel %vm902, %v890, %v905
      %v907 = vsel %vm901, %v904, %v906
      %v908 = vsel %vm900, %v887, %v890
      %v909 = vsel %vm903, %v896, 920167782
      %v910 = vsel %vm902, %v893, %v909
      %v911 = vsel %vm901, %v908, %v910
      %v912 = vsel %vm900, %v890, %v893
      %v913 = vsel %vm903, %v899, 1326507024
      %v914 = vsel %vm902, %v896, %v913
      %v915 = vsel %vm901, %v912, %v914
      %v916 = vshll.u32 %v876, 8
      %v917 = vmul.u32.u64.compose %v916, %v915
      %v918 = vextract.low.u32 %v917
      %v919 = vextract.high.u32 %v917
      %v920 = vmul.u32.u64.compose %v916, %v911
      %v921 = vextract.low.u32 %v920
      %v922 = vextract.high.u32 %v920
      %v923 = vmul.u32 %v916, %v907
      %v924 = vadd.s32 %v919, %v921
      %vm925 = vc.u32 %v919, %v921
      %v926 = vadd.s32 %v922, 1
      %v927 = vsel %vm925, %v926, %v922
      %v928 = vadd.s32 %v923, %v927
      %v929 = vadd.s32 %v928, 536870912
      %v930 = vshrl.u32 %v929, 30
      %v931 = vshll.u32 %v930, 30
      %v932 = vsub.s32 %v928, %v931
      %vm933 = vcmp.lt.s32.totalorder %v932, 0
      %v934 = vsub.s32 0, %v932
      %v935 = vsel %vm933, %v934, %v932
      %v936 = vclz %v935
      %v937 = vsub.s32 %v936, 2
      %vm938 = vcmp.gt.s32.totalorder 0, %v937
      %v939 = vsel %vm938, 0, %v937
      %v940 = vsub.s32 32, %v939
      %v941 = vshll.u32 %v932, %v939
      %v942 = vshrl.u32 %v924, %v940
      %v943 = vor.u32 %v941, %v942
      %v944 = vsub.s32 4294967266, %v939
      %v945 = vadd.s32 %v944, 127
      %v946 = vshll.u32 %v945, 23
      %v947 = vor.u32 4788187, %v946
      %v948 = vand.u32 2147483647, %v947
      %v950 = vcvt.s32.f32 %v943
      %v951 = vmul.f32 %v950, %v948
      %v952 = vxor.u32 %v951, 2147483648
      %v953 = vsel %vm870, %v952, %v951
      %v954 = vsub.s32 4, %v930
      %v955 = vsel %vm870, %v954, %v930
      %v956 = vsel %vm869, %v764, %v953
      %v957 = vsel %vm869, 0, %v955
      %v958 = vcosq.f32.pop %v956
      %v959 = vsinq.f32.pop %v956
      %vm960 = vweird.f32 %v764
      %v961 = vand.u32 %v957, 3
      %vm962 = vcmp.lt.s32.totalorder %v961, 2
      %vm963 = vcmp.eq.s32.totalorder %v961, 0
      %v964 = vxor.u32 %v959, 2147483648
      %v965 = vsel %vm963, %v958, %v964
      %vm966 = vcmp.eq.s32.totalorder %v961, 2
      %v967 = vxor.u32 %v958, 2147483648
      %v968 = vsel %vm966, %v967, %v959
      %v969 = vsel %vm962, %v965, %v968
      %v970 = vsel %vm960, nan, %v969
      %v971 = vmul.f32 %v576, %v867
      %v972 = vmul.f32 %v577, %v970
      %v975 = vcombine.low %v971, %v972
      %977 = vst [vmem:[%s312] sm:$0xff] %v975
      %v978 = vand.u32 2147483647, %v763
      %vm979 = vcmp.le.f32.partialorder %v978, 0.7853982
      %vm980 = vcmp.lt.s32.totalorder %v763, 0
      %v981 = vand.u32 %v763, 2139095040
      %v982 = vshrl.u32 %v981, 23
      %v983 = vsub.s32 %v982, 127
      %v984 = vand.u32 2147483647, %v763
      %v985 = vand.u32 %v984, 8388607
      %v986 = vor.u32 %v985, 8388608
      %v987 = vsub.s32 0, %v986
      %v988 = vadd.s32 %v983, 1
      %vm989 = vcmp.gt.s32.totalorder %v988, 0
      %v990 = vsel %vm989, %v988, 0
      %v991 = vshrl.u32 %v990, 5
      %v992 = vand.u32 %v990, 31
      %v993 = vsub.s32 32, %v992
      %v994 = vshrl.u32 683565275, %v993
      %v995 = vshll.u32 683565275, %v992
      %v996 = vshrl.u32 2475754826, %v993
      %v997 = vor.u32 %v995, %v996
      %v998 = vshll.u32 2475754826, %v992
      %v999 = vshrl.u32 2131351028, %v993
      %v1000 = vor.u32 %v998, %v999
      %v1001 = vshll.u32 2131351028, %v992
      %v1002 = vshrl.u32 2102212464, %v993
      %v1003 = vor.u32 %v1001, %v1002
      %v1004 = vshll.u32 2102212464, %v992
      %v1005 = vshrl.u32 920167782, %v993
      %v1006 = vor.u32 %v1004, %v1005
      %v1007 = vshll.u32 920167782, %v992
      %v1008 = vshrl.u32 1326507024, %v993
      %v1009 = vor.u32 %v1007, %v1008
      %vm1010 = vcmp.lt.s32.totalorder %v991, 1
      %vm1011 = vcmp.lt.s32.totalorder %v991, 2
      %vm1012 = vcmp.lt.s32.totalorder %v991, 3
      %vm1013 = vcmp.lt.s32.totalorder %v991, 4
      %v1014 = vsel %vm1010, %v994, %v997
      %v1015 = vsel %vm1013, %v1003, 2102212464
      %v1016 = vsel %vm1012, %v1000, %v1015
      %v1017 = vsel %vm1011, %v1014, %v1016
      %v1018 = vsel %vm1010, %v997, %v1000
      %v1019 = vsel %vm1013, %v1006, 920167782
      %v1020 = vsel %vm1012, %v1003, %v1019
      %v1021 = vsel %vm1011, %v1018, %v1020
      %v1022 = vsel %vm1010, %v1000, %v1003
      %v1023 = vsel %vm1013, %v1009, 1326507024
      %v1024 = vsel %vm1012, %v1006, %v1023
      %v1025 = vsel %vm1011, %v1022, %v1024
      %v1026 = vshll.u32 %v986, 8
      %v1027 = vmul.u32.u64.compose %v1026, %v1025
      %v1028 = vextract.low.u32 %v1027
      %v1029 = vextract.high.u32 %v1027
      %v1030 = vmul.u32.u64.compose %v1026, %v1021
      %v1031 = vextract.low.u32 %v1030
      %v1032 = vextract.high.u32 %v1030
      %v1033 = vmul.u32 %v1026, %v1017
      %v1034 = vadd.s32 %v1029, %v1031
      %vm1035 = vc.u32 %v1029, %v1031
      %v1036 = vadd.s32 %v1032, 1
      %v1037 = vsel %vm1035, %v1036, %v1032
      %v1038 = vadd.s32 %v1033, %v1037
      %v1039 = vadd.s32 %v1038, 536870912
      %v1040 = vshrl.u32 %v1039, 30
      %v1041 = vshll.u32 %v1040, 30
      %v1042 = vsub.s32 %v1038, %v1041
      %vm1043 = vcmp.lt.s32.totalorder %v1042, 0
      %v1044 = vsub.s32 0, %v1042
      %v1045 = vsel %vm1043, %v1044, %v1042
      %v1046 = vclz %v1045
      %v1047 = vsub.s32 %v1046, 2
      %vm1048 = vcmp.gt.s32.totalorder 0, %v1047
      %v1049 = vsel %vm1048, 0, %v1047
      %v1050 = vsub.s32 32, %v1049
      %v1051 = vshll.u32 %v1042, %v1049
      %v1052 = vshrl.u32 %v1034, %v1050
      %v1053 = vor.u32 %v1051, %v1052
      %v1054 = vsub.s32 4294967266, %v1049
      %v1055 = vadd.s32 %v1054, 127
      %v1056 = vshll.u32 %v1055, 23
      %v1057 = vor.u32 4788187, %v1056
      %v1058 = vand.u32 2147483647, %v1057
      %v1060 = vcvt.s32.f32 %v1053
      %v1061 = vmul.f32 %v1060, %v1058
      %v1062 = vxor.u32 %v1061, 2147483648
      %v1063 = vsel %vm980, %v1062, %v1061
      %v1064 = vsub.s32 4, %v1040
      %v1065 = vsel %vm980, %v1064, %v1040
      %v1066 = vsel %vm979, %v763, %v1063
      %v1067 = vsel %vm979, 0, %v1065
      %v1068 = vcosq.f32.pop %v1066
      %v1069 = vsinq.f32.pop %v1066
      %vm1070 = vweird.f32 %v763
      %v1071 = vadd.s32 %v1067, 3
      %v1072 = vand.u32 %v1071, 3
      %vm1073 = vcmp.lt.s32.totalorder %v1072, 2
      %vm1074 = vcmp.eq.s32.totalorder %v1072, 0
      %v1075 = vxor.u32 %v1069, 2147483648
      %v1076 = vsel %vm1074, %v1068, %v1075
      %vm1077 = vcmp.eq.s32.totalorder %v1072, 2
      %v1078 = vxor.u32 %v1068, 2147483648
      %v1079 = vsel %vm1077, %v1078, %v1069
      %v1080 = vsel %vm1073, %v1076, %v1079
      %v1081 = vsel %vm1070, nan, %v1080
      %v1082 = vand.u32 2147483647, %v764
      %vm1083 = vcmp.le.f32.partialorder %v1082, 0.7853982
      %vm1084 = vcmp.lt.s32.totalorder %v764, 0
      %v1085 = vand.u32 %v764, 2139095040
      %v1086 = vshrl.u32 %v1085, 23
      %v1087 = vsub.s32 %v1086, 127
      %v1088 = vand.u32 2147483647, %v764
      %v1089 = vand.u32 %v1088, 8388607
      %v1090 = vor.u32 %v1089, 8388608
      %v1091 = vsub.s32 0, %v1090
      %v1092 = vadd.s32 %v1087, 1
      %vm1093 = vcmp.gt.s32.totalorder %v1092, 0
      %v1094 = vsel %vm1093, %v1092, 0
      %v1095 = vshrl.u32 %v1094, 5
      %v1096 = vand.u32 %v1094, 31
      %v1097 = vsub.s32 32, %v1096
      %v1098 = vshrl.u32 683565275, %v1097
      %v1099 = vshll.u32 683565275, %v1096
      %v1100 = vshrl.u32 2475754826, %v1097
      %v1101 = vor.u32 %v1099, %v1100
      %v1102 = vshll.u32 2475754826, %v1096
      %v1103 = vshrl.u32 2131351028, %v1097
      %v1104 = vor.u32 %v1102, %v1103
      %v1105 = vshll.u32 2131351028, %v1096
      %v1106 = vshrl.u32 2102212464, %v1097
      %v1107 = vor.u32 %v1105, %v1106
      %v1108 = vshll.u32 2102212464, %v1096
      %v1109 = vshrl.u32 920167782, %v1097
      %v1110 = vor.u32 %v1108, %v1109
      %v1111 = vshll.u32 920167782, %v1096
      %v1112 = vshrl.u32 1326507024, %v1097
      %v1113 = vor.u32 %v1111, %v1112
      %vm1114 = vcmp.lt.s32.totalorder %v1095, 1
      %vm1115 = vcmp.lt.s32.totalorder %v1095, 2
      %vm1116 = vcmp.lt.s32.totalorder %v1095, 3
      %vm1117 = vcmp.lt.s32.totalorder %v1095, 4
      %v1118 = vsel %vm1114, %v1098, %v1101
      %v1119 = vsel %vm1117, %v1107, 2102212464
      %v1120 = vsel %vm1116, %v1104, %v1119
      %v1121 = vsel %vm1115, %v1118, %v1120
      %v1122 = vsel %vm1114, %v1101, %v1104
      %v1123 = vsel %vm1117, %v1110, 920167782
      %v1124 = vsel %vm1116, %v1107, %v1123
      %v1125 = vsel %vm1115, %v1122, %v1124
      %v1126 = vsel %vm1114, %v1104, %v1107
      %v1127 = vsel %vm1117, %v1113, 1326507024
      %v1128 = vsel %vm1116, %v1110, %v1127
      %v1129 = vsel %vm1115, %v1126, %v1128
      %v1130 = vshll.u32 %v1090, 8
      %v1131 = vmul.u32.u64.compose %v1130, %v1129
      %v1132 = vextract.low.u32 %v1131
      %v1133 = vextract.high.u32 %v1131
      %v1134 = vmul.u32.u64.compose %v1130, %v1125
      %v1135 = vextract.low.u32 %v1134
      %v1136 = vextract.high.u32 %v1134
      %v1137 = vmul.u32 %v1130, %v1121
      %v1138 = vadd.s32 %v1133, %v1135
      %vm1139 = vc.u32 %v1133, %v1135
      %v1140 = vadd.s32 %v1136, 1
      %v1141 = vsel %vm1139, %v1140, %v1136
      %v1142 = vadd.s32 %v1137, %v1141
      %v1143 = vadd.s32 %v1142, 536870912
      %v1144 = vshrl.u32 %v1143, 30
      %v1145 = vshll.u32 %v1144, 30
      %v1146 = vsub.s32 %v1142, %v1145
      %vm1147 = vcmp.lt.s32.totalorder %v1146, 0
      %v1148 = vsub.s32 0, %v1146
      %v1149 = vsel %vm1147, %v1148, %v1146
      %v1150 = vclz %v1149
      %v1151 = vsub.s32 %v1150, 2
      %vm1152 = vcmp.gt.s32.totalorder 0, %v1151
      %v1153 = vsel %vm1152, 0, %v1151
      %v1154 = vsub.s32 32, %v1153
      %v1155 = vshll.u32 %v1146, %v1153
      %v1156 = vshrl.u32 %v1138, %v1154
      %v1157 = vor.u32 %v1155, %v1156
      %v1158 = vsub.s32 4294967266, %v1153
      %v1159 = vadd.s32 %v1158, 127
      %v1160 = vshll.u32 %v1159, 23
      %v1161 = vor.u32 4788187, %v1160
      %v1162 = vand.u32 2147483647, %v1161
      %v1164 = vcvt.s32.f32 %v1157
      %v1165 = vmul.f32 %v1164, %v1162
      %v1166 = vxor.u32 %v1165, 2147483648
      %v1167 = vsel %vm1084, %v1166, %v1165
      %v1168 = vsub.s32 4, %v1144
      %v1169 = vsel %vm1084, %v1168, %v1144
      %v1170 = vsel %vm1083, %v764, %v1167
      %v1171 = vsel %vm1083, 0, %v1169
      %v1172 = vcosq.f32.pop %v1170
      %v1173 = vsinq.f32.pop %v1170
      %vm1174 = vweird.f32 %v764
      %v1175 = vadd.s32 %v1171, 3
      %v1176 = vand.u32 %v1175, 3
      %vm1177 = vcmp.lt.s32.totalorder %v1176, 2
      %vm1178 = vcmp.eq.s32.totalorder %v1176, 0
      %v1179 = vxor.u32 %v1173, 2147483648
      %v1180 = vsel %vm1178, %v1172, %v1179
      %vm1181 = vcmp.eq.s32.totalorder %v1176, 2
      %v1182 = vxor.u32 %v1172, 2147483648
      %v1183 = vsel %vm1181, %v1182, %v1173
      %v1184 = vsel %vm1177, %v1180, %v1183
      %v1185 = vsel %vm1174, nan, %v1184
      %v1186 = vmul.f32 %v576, %v1081
      %v1187 = vmul.f32 %v577, %v1185
      %v1190 = vcombine.low %v1186, %v1187
      %1192 = vst [vmem:[%s322] sm:$0xff] %v1190
      %s1193 = smul.u32 2, %s22
      %p1194 = scmp.lt.s32.totalorder %s21, 1
      %s1195 = scalar_select %p1194, %s21, 1
      %p1196 = scmp.lt.s32.totalorder %s1193, 1
      %s1197 = scalar_select %p1196, %s1193, 1
      %s1198 = smul.addr %s1195, 2
      %s1199 = sadd.s32 %s1197, %s1198
      %s1200 = smul.addr %s1199, 4
      %s1201 = scalar_lea.vmem %s4, %s1200
      %s1202 = smul.u32 2, %s22
      %p1203 = scmp.lt.s32.totalorder %s21, 1
      %s1204 = scalar_select %p1203, %s21, 1
      %p1205 = scmp.lt.s32.totalorder %s1202, 1
      %s1206 = scalar_select %p1205, %s1202, 1
      %s1207 = smul.addr %s1204, 2
      %s1208 = sadd.s32 %s1206, %s1207
      %s1209 = smul.addr %s1208, 4
      %s1210 = scalar_lea.vmem %s5, %s1209
      // Predicated region
      $region37: #{freblock_forward.1} parent=35 // pred_check
        %p1211 = pneg %p147
      $region38: #{freblock_forward.1} parent=35 // pred_check_branch
        %1213 = sbr.rel (%p1211) target = $region40
      $region39: #{freblock_forward.1} parent=35 // pred_region
        %s1214 = smul.u32 2, %s22
      $region40: #{freblock_forward.1} parent=35 // pred_fallthru
        _
      // Predicated region
      $region41: #{freblock_forward.1} parent=35 // pred_check
        %p1215 = pneg %p175
      $region42: #{freblock_forward.1} parent=35 // pred_check_branch
        %1217 = sbr.rel (%p1215) target = $region44
      $region43: #{freblock_forward.1} parent=35 // pred_region
        %s1218 = smul.u32 2, %s22
      $region44: #{freblock_forward.1} parent=35 // pred_fallthru
        _
    $region36: #{freblock_forward.1} parent=5 // pred_fallthru
      _
    %p1219 = scmp.le.s32.totalorder 2, %s12
    // Predicated region
    $region45: #{freblock_forward.1} parent=5 // pred_check
      %p1220 = pneg %p1219
    $region46: #{freblock_forward.1} parent=5 // pred_check_branch
      %1222 = sbr.rel (%p1220) target = $region48
    $region47: #{freblock_forward.1} parent=5 // pred_region
      %s1223 = ssub.s32 %s12, 2
      // Predicated region
      $region49: #{freblock_forward.1} parent=47 // pred_check
        %p1224 = pneg %p153
      $region50: #{freblock_forward.1} parent=47 // pred_check_branch
        %1226 = sbr.rel (%p1224) target = $region52
      $region51: #{freblock_forward.1} parent=47 // pred_region
        %s1227 = smul.u32 2, %s24
        %p1228 = scmp.lt.s32.totalorder %s23, 1
        %s1229 = scalar_select %p1228, %s23, 1
        %p1230 = scmp.lt.s32.totalorder %s1227, 1
        %s1231 = scalar_select %p1230, %s1227, 1
        %s1232 = smul.addr %s1229, 2
        %s1233 = sadd.s32 %s1231, %s1232
        %s1234 = smul.addr %s1233, 4
        %s1235 = scalar_lea.vmem %s4, %s1234
      $region52: #{freblock_forward.1} parent=47 // pred_fallthru
        _
      // Predicated region
      $region53: #{freblock_forward.1} parent=47 // pred_check
        %p1236 = pneg %p181
      $region54: #{freblock_forward.1} parent=47 // pred_check_branch
        %1238 = sbr.rel (%p1236) target = $region56
      $region55: #{freblock_forward.1} parent=47 // pred_region
        %s1239 = smul.u32 2, %s24
        %p1240 = scmp.lt.s32.totalorder %s23, 1
        %s1241 = scalar_select %p1240, %s23, 1
        %p1242 = scmp.lt.s32.totalorder %s1239, 1
        %s1243 = scalar_select %p1242, %s1239, 1
        %s1244 = smul.addr %s1241, 2
        %s1245 = sadd.s32 %s1243, %s1244
        %s1246 = smul.addr %s1245, 4
        %s1247 = scalar_lea.vmem %s5, %s1246
      $region56: #{freblock_forward.1} parent=47 // pred_fallthru
        _
    $region48: #{freblock_forward.1} parent=5 // pred_fallthru
      _
  $region6: #{freblock_forward.1} parent=0 // loop_footer
    %s16 = sadd.s32 1, %s12
  $region7: #{freblock_forward.1} parent=0 // loop_footer_branch
    %11 = sbr.rel target = $region3
  $region8: #{freblock_forward.1} parent=0 // loop_exit
    _

</llo_original>
